<compile_context>
chip_gen: v7x
topology: tpu7x:2x2x1
jax: 0.10.0
libtpu: 0.0.40
codegen_flags: <defaults>
</compile_context>

<pallas_src>
import jax
import jax.numpy as jnp
from jax.experimental import pallas as pl
from jax.experimental.pallas import tpu as pltpu

# TODO(synk): HF tokenizer + pretrained AutoModel encoder have no Pallas
# equivalent (host-side string processing / checkpoint load); the encoder's
# last_hidden_state is taken as the kernel input instead.

_LANE = 128  # lane width


def _round_up(x, m):
    return (x + m - 1) // m * m


def esci_head_kernel(cls_ref, w1_ref, b1_ref, w2_ref, b2_ref, out_ref):
    """One batch tile: logits = ReLU(cls @ W1 + b1) @ W2 + b2."""
    # First linear: (TB, H) @ (H, D1) on the MXU (bf16 inputs, f32 accumulate).
    h = jnp.dot(cls_ref[...], w1_ref[...], preferred_element_type=jnp.float32)
    h = jnp.maximum(h + b1_ref[...], 0.0)                       # bias + ReLU (VPU)
    # Second linear: (TB, D1) @ (D1, Cp), f32 accumulate.
    logits = jnp.dot(h, w2_ref[...], preferred_element_type=jnp.float32) + b2_ref[...]
    out_ref[...] = logits.astype(out_ref.dtype)


def esci_head(last_hidden_state, w1, b1, w2, b2, *, block_b=512):
    """CLS pooling + 2-layer MLP classification head.

    last_hidden_state : (B, S, H) encoder output (f32 or bf16).
    w1 : (H, D1)  first Linear weight, pre-transposed to (in, out).
    b1 : (D1,)
    w2 : (D1, C)  second Linear weight, (in, out).
    b2 : (C,)
    Returns f32 logits of shape (B, C).
    """
    B, S, H = last_hidden_state.shape
    D1 = w1.shape[1]
    C = w2.shape[1]

    # CLS pooling before the pallas_call so only B*H elements (not B*S*H)
    # ever hit the kernel's HBM->VMEM stream.
    cls = last_hidden_state[:, 0, :]                             # (B, H)

    # Lane-dense padding of the head dims (C=4 would otherwise force a masked
    # store on a 4/128 lane fraction). Padded rows/cols are zero, so the math
    # is unchanged; the wrapper slices the padding away.
    D1p = _round_up(D1, _LANE)
    Cp = _round_up(C, _LANE)

    w1p = jnp.pad(w1, ((0, 0), (0, D1p - D1)))
    b1p = jnp.pad(b1.astype(jnp.float32).reshape(1, D1), ((0, 0), (0, D1p - D1)))
    w2p = jnp.pad(w2.astype(jnp.float32), ((0, D1p - D1), (0, Cp - C)))
    b2p = jnp.pad(b2.astype(jnp.float32).reshape(1, C), ((0, 0), (0, Cp - C)))

    # Batch tiling: TB rows per grid step, aligned to the (packed) sublane
    # granularity of the activation dtype, capped at block_b so per-buffer
    # VMEM stays small even on v7x (64 MiB).  The batch axis is "parallel".
    itemsize = jnp.dtype(cls.dtype).itemsize
    sublane = 8 * max(1, 4 // itemsize)                          # 8 f32 / 16 bf16
    TB = min(_round_up(block_b, sublane), _round_up(B, sublane))
    Bp = _round_up(B, TB)
    if Bp != B:
        cls = jnp.pad(cls, ((0, Bp - B), (0, 0)))

    cost = pl.CostEstimate(
        flops=2 * Bp * (H * D1p + D1p * Cp),
        transcendentals=0,
        bytes_accessed=(Bp * H * itemsize                        # cls stream (dominant)
                        + H * D1p * jnp.dtype(w1p.dtype).itemsize
                        + (D1p * Cp + D1p + Cp) * 4              # resident params
                        + Bp * Cp * 4),                          # logits out
    )

    out = pl.pallas_call(
        esci_head_kernel,
        out_shape=jax.ShapeDtypeStruct((Bp, Cp), jnp.float32),
        grid=(Bp // TB,),
        in_specs=[
            pl.BlockSpec((TB, H), lambda i: (i, 0)),             # cls: streamed over grid
            pl.BlockSpec((H, D1p), lambda i: (0, 0)),            # W1: resident
            pl.BlockSpec((1, D1p), lambda i: (0, 0)),            # b1: resident
            pl.BlockSpec((D1p, Cp), lambda i: (0, 0)),           # W2: resident
            pl.BlockSpec((1, Cp), lambda i: (0, 0)),             # b2: resident
        ],
        out_specs=pl.BlockSpec((TB, Cp), lambda i: (i, 0)),      # lane-dense output
        compiler_params=pltpu.CompilerParams(
            dimension_semantics=("parallel",)),
        cost_estimate=cost,
    )(cls, w1p, b1p, w2p, b2p)

    return out[:B, :C]


def reference_head(last_hidden_state, w1, b1, w2, b2):
    cls = last_hidden_state[:, 0, :]
    h = jnp.dot(cls, w1, preferred_element_type=jnp.float32) + b1.astype(jnp.float32)
    h = jnp.maximum(h, 0.0)
    return (jnp.dot(h, w2.astype(jnp.float32), preferred_element_type=jnp.float32)
            + b2.astype(jnp.float32))


if __name__ == "__main__":
    # Small shapes consistent with the module's forward:
    #   batch B=2, seq S=8 (<= max_length 128), hidden H=32, num_classes=4.
    B, S, H = 2, 8, 32
    D1, C = 128, 4

    key = jax.random.PRNGKey(0)
    k_hs, k_w1, k_b1, k_w2, k_b2 = jax.random.split(key, 5)

    # Synthetic "encoder_outputs.last_hidden_state" in bf16 (what a bf16
    # encoder would emit): halves the dominant HBM stream; accumulation is f32.
    last_hidden_state = jax.random.normal(
        k_hs, (B, S, H), dtype=jnp.float32).astype(jnp.bfloat16)

    # Deterministic head params, torch-style (out, in), transposed for the kernel.
    w1_t = (jax.random.normal(k_w1, (D1, H), dtype=jnp.float32) / jnp.sqrt(H)).astype(jnp.bfloat16)
    b1_t = jax.random.normal(k_b1, (D1,), dtype=jnp.float32) * 0.01
    w2_t = jax.random.normal(k_w2, (C, D1), dtype=jnp.float32) / jnp.sqrt(D1)
    b2_t = jax.random.normal(k_b2, (C,), dtype=jnp.float32) * 0.01

    w1 = w1_t.T          # (H, D1)  bf16
    b1 = b1_t            # (D1,)    f32
    w2 = w2_t.T          # (D1, C)  f32
    b2 = b2_t            # (C,)     f32

    logits = esci_head(last_hidden_state, w1, b1, w2, b2)
    logits = jax.block_until_ready(logits)

    ref = reference_head(last_hidden_state, w1, b1, w2, b2)
    assert logits.shape == (B, C), logits.shape
    assert jnp.allclose(logits, ref, atol=1e-2, rtol=1e-2), "mismatch vs reference"

    print("KERNEL_OK")
</pallas_src>

<mosaic_0001>
module attributes {stable_mosaic.version = 11 : i64} {
  func.func @esci_head_kernel(%arg0: i32, %arg1: memref<16x32xbf16, #tpu.memory_space<vmem>>, %arg2: memref<32x128xbf16, #tpu.memory_space<vmem>>, %arg3: memref<1x128xf32, #tpu.memory_space<vmem>>, %arg4: memref<128x128xf32, #tpu.memory_space<vmem>>, %arg5: memref<1x128xf32, #tpu.memory_space<vmem>>, %arg6: memref<16x128xf32, #tpu.memory_space<vmem>>) attributes {dimension_semantics = [#tpu.dimension_semantics<parallel>], iteration_bounds = array<i64: 1>, scalar_prefetch = 0 : i64, scratch_operands = 0 : i64, tpu.core_type = #tpu.core_type<tc>, window_params = [{transform_indices = @transform_0, window_bounds = array<i64: 16, 32>}, {pipeline_mode = #tpu.pipeline_mode<synchronous>, transform_indices = @transform_1, window_bounds = array<i64: 32, 128>}, {pipeline_mode = #tpu.pipeline_mode<synchronous>, transform_indices = @transform_2, window_bounds = array<i64: 1, 128>}, {pipeline_mode = #tpu.pipeline_mode<synchronous>, transform_indices = @transform_3, window_bounds = array<i64: 128, 128>}, {pipeline_mode = #tpu.pipeline_mode<synchronous>, transform_indices = @transform_4, window_bounds = array<i64: 1, 128>}, {transform_indices = @transform_5, window_bounds = array<i64: 16, 128>}]} {
    %c0 = arith.constant 0 : index
    %c0_0 = arith.constant 0 : index
    %0 = vector.load %arg1[%c0, %c0_0] : memref<16x32xbf16, #tpu.memory_space<vmem>>, vector<16x32xbf16>
    %c0_1 = arith.constant 0 : index
    %c0_2 = arith.constant 0 : index
    %1 = vector.load %arg2[%c0_1, %c0_2] : memref<32x128xbf16, #tpu.memory_space<vmem>>, vector<32x128xbf16>
    %cst = arith.constant dense<0.000000e+00> : vector<16x128xf32>
    %2 = tpu.matmul %0, %1, %cst {dimension_numbers = #tpu.dot_dimension_numbers<[1], [0], [0], [1], [0, 0, 1, 1], [], []>} : vector<16x32xbf16>, vector<32x128xbf16>, vector<16x128xf32> -> vector<16x128xf32>
    %c0_3 = arith.constant 0 : index
    %c0_4 = arith.constant 0 : index
    %3 = vector.load %arg3[%c0_3, %c0_4] : memref<1x128xf32, #tpu.memory_space<vmem>>, vector<1x128xf32>
    %4 = vector.broadcast %3 : vector<1x128xf32> to vector<16x128xf32>
    %5 = arith.addf %2, %4 : vector<16x128xf32>
    %cst_5 = arith.constant 0.000000e+00 : f32
    %6 = vector.broadcast %cst_5 : f32 to vector<16x128xf32>
    %7 = arith.maximumf %5, %6 : vector<16x128xf32>
    %c0_6 = arith.constant 0 : index
    %c0_7 = arith.constant 0 : index
    %8 = vector.load %arg4[%c0_6, %c0_7] : memref<128x128xf32, #tpu.memory_space<vmem>>, vector<128x128xf32>
    %cst_8 = arith.constant dense<0.000000e+00> : vector<16x128xf32>
    %9 = tpu.matmul %7, %8, %cst_8 {dimension_numbers = #tpu.dot_dimension_numbers<[1], [0], [0], [1], [0, 0, 1, 1], [], []>} : vector<16x128xf32>, vector<128x128xf32>, vector<16x128xf32> -> vector<16x128xf32>
    %c0_9 = arith.constant 0 : index
    %c0_10 = arith.constant 0 : index
    %10 = vector.load %arg5[%c0_9, %c0_10] : memref<1x128xf32, #tpu.memory_space<vmem>>, vector<1x128xf32>
    %11 = vector.broadcast %10 : vector<1x128xf32> to vector<16x128xf32>
    %12 = arith.addf %9, %11 : vector<16x128xf32>
    %c0_11 = arith.constant 0 : index
    %c0_12 = arith.constant 0 : index
    %13 = vector.load %arg6[%c0_11, %c0_12] : memref<16x128xf32, #tpu.memory_space<vmem>>, vector<16x128xf32>
    tpu.vector_store %arg6[%c0_11, %c0_12], %12 {strides = array<i32>} : memref<16x128xf32, #tpu.memory_space<vmem>>, vector<16x128xf32>,
    return
  }
  func.func @transform_0(%arg0: i32) -> (i32, i32) {
    %c0_i32 = arith.constant 0 : i32
    %c0_i32_0 = arith.constant 0 : i32
    return %arg0, %c0_i32 : i32, i32
  }
  func.func @transform_1(%arg0: i32) -> (i32, i32) {
    %c0_i32 = arith.constant 0 : i32
    %c0_i32_0 = arith.constant 0 : i32
    %c0_i32_1 = arith.constant 0 : i32
    return %c0_i32, %c0_i32_0 : i32, i32
  }
  func.func @transform_2(%arg0: i32) -> (i32, i32) {
    %c0_i32 = arith.constant 0 : i32
    %c0_i32_0 = arith.constant 0 : i32
    %c0_i32_1 = arith.constant 0 : i32
    return %c0_i32, %c0_i32_0 : i32, i32
  }
  func.func @transform_3(%arg0: i32) -> (i32, i32) {
    %c0_i32 = arith.constant 0 : i32
    %c0_i32_0 = arith.constant 0 : i32
    %c0_i32_1 = arith.constant 0 : i32
    return %c0_i32, %c0_i32_0 : i32, i32
  }
  func.func @transform_4(%arg0: i32) -> (i32, i32) {
    %c0_i32 = arith.constant 0 : i32
    %c0_i32_0 = arith.constant 0 : i32
    %c0_i32_1 = arith.constant 0 : i32
    return %c0_i32, %c0_i32_0 : i32, i32
  }
  func.func @transform_5(%arg0: i32) -> (i32, i32) {
    %c0_i32 = arith.constant 0 : i32
    %c0_i32_0 = arith.constant 0 : i32
    return %arg0, %c0_i32 : i32, i32
  }
}

</mosaic_0001>

<llo_original>
// kernel: tpu_custom_call.1
$region0: #{tpu_custom_call.1}
  #allocation0 [shape = 'u32[]', space=smem, size = 0x4, offset = 0x4, fixed_abs, tag = 'smem constant byte address 0x4 - core index']
  #allocation1 [shape = 'u32[144,128]{1,0:T(1,128)}', space=vmem, size = 0x12000, scoped, tag = 'internal scratch']
  %s0 = inlined_call_operand.hbm [shape: bf16[16,32], index: 0, kind: input, shape index: {}]
  %s1 = inlined_call_operand.hbm [shape: bf16[32,128], index: 1, kind: input, shape index: {}]
  %s2 = inlined_call_operand.vmem [shape: f32[1,128], index: 2, kind: input, shape index: {}]
  %s3 = inlined_call_operand.hbm [shape: f32[128,128], index: 3, kind: input, shape index: {}]
  %s4 = inlined_call_operand.vmem [shape: f32[1,128], index: 4, kind: input, shape index: {}]
  %s5 = inlined_call_operand.hbm [shape: f32[16,128], index: 5, kind: output, shape index: {}]
  %s6 = sld [smem:[#allocation0]]
  $region42: #{tpu_custom_call.1} parent=0
    _
  %s8 = ssub.s32 1, %s6
  %s9 = scalar_select 0, %s8, %s6
  $region1: #{tpu_custom_call.1} parent=0
    #allocation2 [shape = 'u8[4096]{0}', space=vmem, size = 0x1000, scoped, tag = 'input window, operand 0, single buffered']
    #allocation3 [shape = 's32[1]{0}', space=sflag, size = 0x4, scoped, tag = 'scoped memory for tpu_custom_call.1']
    #allocation4 [shape = 's32[1]{0}', space=sflag, size = 0x4, scoped, tag = 'scoped memory for tpu_custom_call.1']
    #allocation5 [shape = 'u8[8192]{0}', space=vmem, size = 0x2000, scoped, tag = 'input window, operand 1, single buffered']
    #allocation6 [shape = 's32[1]{0}', space=sflag, size = 0x4, scoped, tag = 'scoped memory for tpu_custom_call.1']
    #allocation7 [shape = 'u8[65536]{0}', space=vmem, size = 0x10000, scoped, tag = 'input window, operand 3, single buffered']
    #allocation8 [shape = 'u8[8192]{0}', space=vmem, size = 0x2000, scoped, tag = 'output window, operand 0, single buffered']
    %10 = vsyncpa [#allocation3], 0
    %11 = vsyncpa [#allocation6], 0
    %12 = vsyncpa [#allocation4], 0
    // Predicated region
    $region2: #{tpu_custom_call.1} parent=1 // pred_check
      _
    $region3: #{tpu_custom_call.1} parent=1 // pred_check_branch
      %14 = sbr.rel (0) target = $region5
    $region4: #{tpu_custom_call.1} parent=1 // pred_region
      %s16 = ssub.s32 128, 128
      %17 = vsyncadd [#allocation3], %s16
      %s18 = sshll.u32 [#allocation2], 4
      %s19 = int_to_ptr.vmem [resolvable:$true] %s18
      %24 = dma.hbm_to_vmem [thread:$0]  %s0, 128, %s19, [#allocation3], 64, 64, 4
    $region5: #{tpu_custom_call.1} parent=1 // pred_fallthru
      _
    // Predicated region
    $region6: #{tpu_custom_call.1} parent=1 // pred_check
      _
    $region7: #{tpu_custom_call.1} parent=1 // pred_check_branch
      %26 = sbr.rel (0) target = $region9
    $region8: #{tpu_custom_call.1} parent=1 // pred_region
      %s28 = ssub.s32 256, 256
      %29 = vsyncadd [#allocation6], %s28
      %s30 = sshll.u32 [#allocation5], 4
      %s31 = int_to_ptr.vmem [resolvable:$true] %s30
      %36 = dma.hbm_to_vmem [thread:$0]  %s1, 256, %s31, [#allocation6], 64, 64, 4
    $region9: #{tpu_custom_call.1} parent=1 // pred_fallthru
      _
    // Predicated region
    $region10: #{tpu_custom_call.1} parent=1 // pred_check
      _
    $region11: #{tpu_custom_call.1} parent=1 // pred_check_branch
      %38 = sbr.rel (0) target = $region13
    $region12: #{tpu_custom_call.1} parent=1 // pred_region
      _
    $region13: #{tpu_custom_call.1} parent=1 // pred_fallthru
      _
    // Predicated region
    $region14: #{tpu_custom_call.1} parent=1 // pred_check
      _
    $region15: #{tpu_custom_call.1} parent=1 // pred_check_branch
      %40 = sbr.rel (0) target = $region17
    $region16: #{tpu_custom_call.1} parent=1 // pred_region
      %s42 = ssub.s32 2048, 2048
      %43 = vsyncadd [#allocation6], %s42
      %s44 = sshll.u32 [#allocation7], 4
      %s45 = int_to_ptr.vmem [resolvable:$true] %s44
      %50 = dma.hbm_to_vmem [thread:$0]  %s3, 2048, %s45, [#allocation6], 128, 128, 8
    $region17: #{tpu_custom_call.1} parent=1 // pred_fallthru
      _
    // Predicated region
    $region18: #{tpu_custom_call.1} parent=1 // pred_check
      _
    $region19: #{tpu_custom_call.1} parent=1 // pred_check_branch
      %52 = sbr.rel (0) target = $region21
    $region20: #{tpu_custom_call.1} parent=1 // pred_region
      _
    $region21: #{tpu_custom_call.1} parent=1 // pred_fallthru
      _
    // Predicated region
    $region22: #{tpu_custom_call.1} parent=1 // pred_check
      _
    $region23: #{tpu_custom_call.1} parent=1 // pred_check_branch
      %54 = sbr.rel (0) target = $region25
    $region24: #{tpu_custom_call.1} parent=1 // pred_region
      %55 = dma.done [#allocation3], 128
    $region25: #{tpu_custom_call.1} parent=1 // pred_fallthru
      _
    // Predicated region
    $region26: #{tpu_custom_call.1} parent=1 // pred_check
      _
    $region27: #{tpu_custom_call.1} parent=1 // pred_check_branch
      %57 = sbr.rel (0) target = $region29
    $region28: #{tpu_custom_call.1} parent=1 // pred_region
      %58 = dma.done [#allocation6], 256
    $region29: #{tpu_custom_call.1} parent=1 // pred_fallthru
      _
    // Predicated region
    $region30: #{tpu_custom_call.1} parent=1 // pred_check
      _
    $region31: #{tpu_custom_call.1} parent=1 // pred_check_branch
      %60 = sbr.rel (0) target = $region33
    $region32: #{tpu_custom_call.1} parent=1 // pred_region
      %61 = dma.done [#allocation6], 2048
    $region33: #{tpu_custom_call.1} parent=1 // pred_fallthru
      _
    %v63 = vld [vmem:[#allocation2] sm:$0xf]
    %v64 = vld [vmem:[#allocation2 + $0x4] sm:$0xf]
    %v65 = vld [vmem:[#allocation5] sm:$0xf]
    %v66 = vld [vmem:[#allocation5 + $0x4] sm:$0xf]
    %v67 = vld [vmem:[#allocation5 + $0x8] sm:$0xf]
    %v68 = vld [vmem:[#allocation5 + $0xc] sm:$0xf]
    %v69 = vld [vmem:[%s2] sm:$0x1]
    %v71 = vlaneseq
    %v72 = vshrl.u32 %v71, 7
    %v73 = vsub.s32 0, %v72
    %v74 = vrot.slane %v69, %v73
    %v78 = vunpack.c.l.b16 %v63
    %v79 = vunpack.c.l.b16 %v64
    %v80 = vpack.c.b16 %v79, %v78
    %v85 = vunpack.c.l.b16 %v65
    %v86 = vunpack.c.l.b16 %v66
    %v87 = vunpack.c.l.b16 %v67
    %v88 = vunpack.c.l.b16 %v68
    %v89 = vpack.c.b16 %v86, %v85
    %v90 = vpack.c.b16 %v88, %v87
    %vm93 = vcmask 261120
    %v95 = vsel %vm93, %v80, 0
    %97 = vmatprep.subr.bf16.mxu0 0
    %98 = vmatpush1.bf16.msra.mxu0 %v89
    %99 = vmatprep.subr.bf16.mxu0 0
    %100 = vmatpush1.bf16.msra.mxu0 %v90
    %101 = vmatprep.subr.bf16.mxu0 0
    %102 = vmatpush1.bf16.msra.mxu0 0
    %103 = vmatprep.subr.bf16.mxu0 0
    %104 = vmatpush1.bf16.msra.mxu0 0
    %105 = vmatprep.subr.bf16.mxu0 0
    %106 = vmatpush1.bf16.msra.mxu0 0
    %107 = vmatprep.subr.bf16.mxu0 0
    %108 = vmatpush1.bf16.msra.mxu0 0
    %109 = vmatprep.subr.bf16.mxu0 0
    %110 = vmatpush1.bf16.msra.mxu0 0
    %111 = vmatprep.subr.bf16.mxu0 0
    %112 = vmatpush1.bf16.msra.mxu0 0
    %113 = vmatprep.subr.bf16.mxu0 0
    %114 = vmatpush1.bf16.msra.mxu0 0
    %115 = vmatprep.subr.bf16.mxu0 0
    %116 = vmatpush1.bf16.msra.mxu0 0
    %117 = vmatprep.subr.bf16.mxu0 0
    %118 = vmatpush1.bf16.msra.mxu0 0
    %119 = vmatprep.subr.bf16.mxu0 0
    %120 = vmatpush1.bf16.msra.mxu0 0
    %121 = vmatprep.subr.bf16.mxu0 0
    %122 = vmatpush1.bf16.msra.mxu0 0
    %123 = vmatprep.subr.bf16.mxu0 0
    %124 = vmatpush1.bf16.msra.mxu0 0
    %125 = vmatprep.subr.bf16.mxu0 0
    %126 = vmatpush1.bf16.msra.mxu0 0
    %127 = vmatprep.subr.bf16.mxu0 0
    %128 = vmatpush1.bf16.msra.mxu0 0
    %129 = vmatprep.mubr.bf16.mxu0 0
    %130 = vmatmul.mubr.bf16.gmra.mrb[0].mxu0 %v95
    %v131 = vpop.f32.mrb[0].mxu0
    %v132 = vadd.f32 %v74, %v131
    %v133 = vpop.f32.mrb[0].mxu0
    %v134 = vpop.f32.mrb[0].mxu0
    %v135 = vadd.f32 %v74, %v134
    %v136 = vpop.f32.mrb[0].mxu0
    %137 = vdwg.mxu0
    %v138 = vmax.f32 %v132, 0.0
    %v139 = vmax.f32 %v135, 0.0
    %v140 = vld [vmem:[#allocation7] sm:$0xff]
    %v141 = vld [vmem:[#allocation7 + $0x8] sm:$0xff]
    %v142 = vld [vmem:[#allocation7 + $0x10] sm:$0xff]
    %v143 = vld [vmem:[#allocation7 + $0x18] sm:$0xff]
    %v144 = vld [vmem:[#allocation7 + $0x20] sm:$0xff]
    %v145 = vld [vmem:[#allocation7 + $0x28] sm:$0xff]
    %v146 = vld [vmem:[#allocation7 + $0x30] sm:$0xff]
    %v147 = vld [vmem:[#allocation7 + $0x38] sm:$0xff]
    %v148 = vld [vmem:[#allocation7 + $0x40] sm:$0xff]
    %v149 = vld [vmem:[#allocation7 + $0x48] sm:$0xff]
    %v150 = vld [vmem:[#allocation7 + $0x50] sm:$0xff]
    %v151 = vld [vmem:[#allocation7 + $0x58] sm:$0xff]
    %v152 = vld [vmem:[#allocation7 + $0x60] sm:$0xff]
    %v153 = vld [vmem:[#allocation7 + $0x68] sm:$0xff]
    %v154 = vld [vmem:[#allocation7 + $0x70] sm:$0xff]
    %v155 = vld [vmem:[#allocation7 + $0x78] sm:$0xff]
    %v156 = vld [vmem:[%s4] sm:$0x1]
    %v158 = vlaneseq
    %v159 = vshrl.u32 %v158, 7
    %v160 = vsub.s32 0, %v159
    %v161 = vrot.slane %v156, %v160
    %163 = vmatprep.subr.mxu0 0.0
    %164 = vmatpush1.msra.mxu0 %v140
    %165 = vmatprep.subr.mxu0 0.0
    %166 = vmatpush1.msra.mxu0 %v141
    %167 = vmatprep.subr.mxu0 0.0
    %168 = vmatpush1.msra.mxu0 %v142
    %169 = vmatprep.subr.mxu0 0.0
    %170 = vmatpush1.msra.mxu0 %v143
    %171 = vmatprep.subr.mxu0 0.0
    %172 = vmatpush1.msra.mxu0 %v144
    %173 = vmatprep.subr.mxu0 0.0
    %174 = vmatpush1.msra.mxu0 %v145
    %175 = vmatprep.subr.mxu0 0.0
    %176 = vmatpush1.msra.mxu0 %v146
    %177 = vmatprep.subr.mxu0 0.0
    %178 = vmatpush1.msra.mxu0 %v147
    %179 = vmatprep.subr.mxu0 0.0
    %180 = vmatpush1.msra.mxu0 %v148
    %181 = vmatprep.subr.mxu0 0.0
    %182 = vmatpush1.msra.mxu0 %v149
    %183 = vmatprep.subr.mxu0 0.0
    %184 = vmatpush1.msra.mxu0 %v150
    %185 = vmatprep.subr.mxu0 0.0
    %186 = vmatpush1.msra.mxu0 %v151
    %187 = vmatprep.subr.mxu0 0.0
    %188 = vmatpush1.msra.mxu0 %v152
    %189 = vmatprep.subr.mxu0 0.0
    %190 = vmatpush1.msra.mxu0 %v153
    %191 = vmatprep.subr.mxu0 0.0
    %192 = vmatpush1.msra.mxu0 %v154
    %193 = vmatprep.subr.mxu0 0.0
    %194 = vmatpush1.msra.mxu0 %v155
    %195 = vmatprep.subr.mxu0 0.0
    %196 = vmatpush1.msra.mxu0 0.0
    %197 = vmatprep.subr.mxu0 0.0
    %198 = vmatpush1.msra.mxu0 0.0
    %199 = vmatprep.subr.mxu0 0.0
    %200 = vmatpush1.msra.mxu0 0.0
    %201 = vmatprep.subr.mxu0 0.0
    %202 = vmatpush1.msra.mxu0 0.0
    %203 = vmatprep.subr.mxu0 0.0
    %204 = vmatpush1.msra.mxu0 0.0
    %205 = vmatprep.subr.mxu0 0.0
    %206 = vmatpush1.msra.mxu0 0.0
    %207 = vmatprep.subr.mxu0 0.0
    %208 = vmatpush1.msra.mxu0 0.0
    %209 = vmatprep.subr.mxu0 0.0
    %210 = vmatpush1.msra.mxu0 0.0
    %211 = vmatprep.subr.mxu0 0.0
    %212 = vmatpush1.msra.mxu0 0.0
    %213 = vmatprep.subr.mxu0 0.0
    %214 = vmatpush1.msra.mxu0 0.0
    %215 = vmatprep.subr.mxu0 0.0
    %216 = vmatpush1.msra.mxu0 0.0
    %217 = vmatprep.subr.mxu0 0.0
    %218 = vmatpush1.msra.mxu0 0.0
    %219 = vmatprep.subr.mxu0 0.0
    %220 = vmatpush1.msra.mxu0 0.0
    %221 = vmatprep.subr.mxu0 0.0
    %222 = vmatpush1.msra.mxu0 0.0
    %223 = vmatprep.subr.mxu0 0.0
    %224 = vmatpush1.msra.mxu0 0.0
    %225 = vmatprep.subr.mxu0 0.0
    %226 = vmatpush1.msra.mxu0 0.0
    %227 = vmatprep.mubr.f32.mxu0 0.0
    %228 = vmatmul.mubr.f32.gmra.mrb[0].mxu0 %v138
    %v229 = vpop.f32.mrb[0].mxu0
    %v230 = vadd.f32 %v161, %v229
    %v231 = vpop.f32.mrb[0].mxu0
    %232 = vmatprep.mubr.f32.mxu0 0.0
    %233 = vmatmul.mubr.f32.gmra.mrb[0].mxu0 %v139
    %v234 = vpop.f32.mrb[0].mxu0
    %v235 = vadd.f32 %v161, %v234
    %v236 = vpop.f32.mrb[0].mxu0
    %237 = vdwg.mxu0
    %238 = vst [vmem:[#allocation8] sm:$0xff] %v230
    %239 = vst [vmem:[#allocation8 + $0x8] sm:$0xff] %v235
    // Predicated region
    $region34: #{tpu_custom_call.1} parent=1 // pred_check
      _
    $region35: #{tpu_custom_call.1} parent=1 // pred_check_branch
      %241 = sbr.rel (0) target = $region37
    $region36: #{tpu_custom_call.1} parent=1 // pred_region
      %s243 = ssub.s32 256, 256
      %244 = vsyncadd [#allocation4], %s243
      %s245 = sshll.u32 [#allocation8], 4
      %s246 = int_to_ptr.vmem [resolvable:$true] %s245
      %251 = dma.vmem_to_hbm [thread:$0]  %s246, 256, %s5, [#allocation4], 128, 128, 8
    $region37: #{tpu_custom_call.1} parent=1 // pred_fallthru
      _
    // Predicated region
    $region38: #{tpu_custom_call.1} parent=1 // pred_check
      _
    $region39: #{tpu_custom_call.1} parent=1 // pred_check_branch
      %253 = sbr.rel (0) target = $region41
    $region40: #{tpu_custom_call.1} parent=1 // pred_region
      %254 = dma.done [#allocation4], 256
    $region41: #{tpu_custom_call.1} parent=1 // pred_fallthru
      _
    %255 = vsyncpa [#allocation3], 1
    %256 = vsyncpa [#allocation6], 1
    %257 = vsyncpa [#allocation4], 1

</llo_original>
